<compile_context>
chip_gen: v7x
topology: tpu7x:2x2x1
jax: 0.10.0
libtpu: 0.0.40
codegen_flags: <defaults>
</compile_context>

<pallas_src>
import functools

import jax
import jax.numpy as jnp
from jax.experimental import pallas as pl
from jax.experimental.pallas import tpu as pltpu

_LANE = 128  # head widths are zero-padded to one full lane group (unmasked stores)


def _round_up(x, m):
    return (x + m - 1) // m * m


def _layout(V, H):
    """Row offsets of each section inside the packed (N, 128) f32 weight slab.
    All offsets are multiples of 8 so in-kernel slices stay sublane-aligned."""
    off = {}
    r = 0
    off["ew"] = r;   r += _round_up(V, 8)   # Ew = embedding @ W_ih        (V, H)
    off["bsum"] = r; r += 8                 # b_ih + b_hh                  (1, H)
    off["whh"] = r;  r += H                 # W_hh                         (H, H)
    off["w1"] = r;   r += H                 # W1, cols zero-padded to 128  (H, 128)
    off["b1"] = r;   r += 8                 # b1, zero-padded              (1, 128)
    off["w2"] = r;   r += _LANE             # W2, zero-padded              (128, 128)
    off["b2"] = r;   r += 8                 # b2, zero-padded              (1, 128)
    return off, r


def prepare_params(raw):
    """One-time (offline) parameter preparation: fold, combine, pad, pack."""
    V, D = raw["embedding"].shape
    H = raw["w_hh"].shape[0]
    F1 = raw["w1"].shape[1]
    C = raw["w2"].shape[1]
    assert H == _LANE, "packed-slab layout assumes hidden_size == 128"
    off, total = _layout(V, H)

    ew = jnp.dot(raw["embedding"], raw["w_ih"])                       # (V, H)
    bsum = (raw["b_ih"] + raw["b_hh"]).reshape(1, H)

    slab = jnp.zeros((total, _LANE), jnp.float32)
    slab = slab.at[off["ew"]:off["ew"] + V, :H].set(ew)
    slab = slab.at[off["bsum"]:off["bsum"] + 1, :H].set(bsum)
    slab = slab.at[off["whh"]:off["whh"] + H, :H].set(raw["w_hh"])
    slab = slab.at[off["w1"]:off["w1"] + H, :F1].set(raw["w1"])
    slab = slab.at[off["b1"]:off["b1"] + 1, :F1].set(raw["b1"].reshape(1, F1))
    slab = slab.at[off["w2"]:off["w2"] + F1, :C].set(raw["w2"])
    slab = slab.at[off["b2"]:off["b2"] + 1, :C].set(raw["b2"].reshape(1, C))
    return {"slab": slab, "V": V, "H": H, "num_classes": C, "off": off}


def rnn_head_kernel(ids_ref, w_ref, out_ref, *, V, H, T, off):
    """Fused embedding+projection, Elman recurrence, linear->ReLU->linear head.

    ids_ref: (B, T) int32 token ids
    w_ref:   (N, 128) f32 packed weight slab (see _layout)
    out_ref: (B, 128) f32 logits in cols [0, num_classes), zeros elsewhere
    """
    B = ids_ref.shape[0]
    Vp = _round_up(V, 8)  # padded rows of Ew; padded one-hot cols never match (ids < V)

    Ew = w_ref[pl.ds(off["ew"], Vp), :]                      # (Vp, 128)
    bsum = w_ref[pl.ds(off["bsum"], 1), :]                   # (1, 128)
    whh = w_ref[pl.ds(off["whh"], H), :].astype(jnp.bfloat16)  # bf16 MXU operand
    w1 = w_ref[pl.ds(off["w1"], H), :]                       # (H, 128)
    b1 = w_ref[pl.ds(off["b1"], 1), :]                       # (1, 128)
    w2 = w_ref[pl.ds(off["w2"], _LANE), :]                   # (128, 128)
    b2 = w_ref[pl.ds(off["b2"], 1), :]                       # (1, 128)

    ids = ids_ref[...]                                       # (B, T) int32
    iota_v = jax.lax.broadcasted_iota(jnp.int32, (B, Vp), 1)

    # Input projection for every time step: pre_t = onehot_t @ (E @ W_ih) + (b_ih+b_hh).
    # Independent of the recurrence -> off the serial critical path (Vp=16, tiny push).
    pre = [jnp.dot((iota_v == ids[:, t:t + 1]).astype(jnp.float32), Ew,
                   preferred_element_type=jnp.float32) + bsum
           for t in range(T)]

    # Serial recurrence (the dominant latency). h0 == 0 so step 0 has no h @ W_hh.
    # bf16 operands on the MXU, f32 accumulation; tanh/adds stay f32 (v5e-safe).
    h = jnp.tanh(pre[0])
    for t in range(1, T):                                    # static T -> full unroll
        hw = jnp.dot(h.astype(jnp.bfloat16), whh, preferred_element_type=jnp.float32)
        h = jnp.tanh(pre[t] + hw)

    # linear -> Dropout -> ReLU -> linear1 on the final hidden state (lane-dense).
    # TODO(synk): Dropout(p=0.003) is identity at inference; training-mode masking
    #             is not implemented.
    z = jnp.maximum(jnp.dot(h, w1, preferred_element_type=jnp.float32) + b1, 0.0)
    out_ref[...] = jnp.dot(z, w2, preferred_element_type=jnp.float32) + b2


def torch_model_forward(x_ids, prepared):
    """Mirrors TorchModel.forward(x) (no-label path). Returns (1, B, num_classes)."""
    B, T = x_ids.shape
    kern = functools.partial(rnn_head_kernel, V=prepared["V"], H=prepared["H"],
                             T=T, off=prepared["off"])
    out = pl.pallas_call(
        kern,
        out_shape=jax.ShapeDtypeStruct((B, _LANE), jnp.float32),
        in_specs=[pl.BlockSpec(memory_space=pltpu.MemorySpace.VMEM),
                  pl.BlockSpec(memory_space=pltpu.MemorySpace.VMEM)],
        out_specs=pl.BlockSpec(memory_space=pltpu.MemorySpace.VMEM),
    )(x_ids, prepared["slab"])
    # torch nn.RNN returns the final hidden state as (1, B, H); the linears keep the
    # leading singleton dim, so the model output is (1, B, num_classes).
    return out[None, :, :prepared["num_classes"]]


def _reference_forward(x_ids, raw, *, bf16_matmul):
    """Pure-JAX reference of the torch forward (for correctness checks)."""
    emb = jnp.take(raw["embedding"], x_ids, axis=0)          # (B, T, D)
    B, T, _ = emb.shape
    H = raw["w_hh"].shape[0]
    h = jnp.zeros((B, H), jnp.float32)
    for t in range(T):
        xp = emb[:, t, :] @ raw["w_ih"] + raw["b_ih"] + raw["b_hh"]
        if bf16_matmul:
            hw = jnp.dot(h.astype(jnp.bfloat16), raw["w_hh"].astype(jnp.bfloat16),
                         preferred_element_type=jnp.float32)
        else:
            hw = h @ raw["w_hh"]
        h = jnp.tanh(xp + hw)
    z = jnp.maximum(h @ raw["w1"] + raw["b1"], 0.0)
    return (z @ raw["w2"] + raw["b2"])[None, :, :]


if __name__ == "__main__":
    key = jax.random.PRNGKey(0)
    vocab_size = 10      # len(vocab)
    input_size = 32      # embedding dim / RNN input
    hidden_size = 128    # RNN hidden size
    B, T = 8, 8          # B>=8 fills vreg sublanes (perf review); scales ~free

    ks = jax.random.split(key, 10)
    # Weights stored pre-transposed as (in_features, out_features); biases as (1, n).
    raw = {
        "embedding": 0.1 * jax.random.normal(ks[0], (vocab_size, input_size), jnp.float32),
        "w_ih": 0.1 * jax.random.normal(ks[1], (input_size, hidden_size), jnp.float32),
        "w_hh": 0.1 * jax.random.normal(ks[2], (hidden_size, hidden_size), jnp.float32),
        "b_ih": 0.1 * jax.random.normal(ks[3], (1, hidden_size), jnp.float32),
        "b_hh": 0.1 * jax.random.normal(ks[4], (1, hidden_size), jnp.float32),
        "w1":   0.1 * jax.random.normal(ks[5], (hidden_size, 64), jnp.float32),
        "b1":   0.1 * jax.random.normal(ks[6], (1, 64), jnp.float32),
        "w2":   0.1 * jax.random.normal(ks[7], (64, 4), jnp.float32),
        "b2":   0.1 * jax.random.normal(ks[8], (1, 4), jnp.float32),
    }
    x_ids = jax.random.randint(ks[9], (B, T), 0, vocab_size, dtype=jnp.int32)

    prepared = prepare_params(raw)      # one-time offline fold/pack
    out = torch_model_forward(x_ids, prepared)
    jax.block_until_ready(out)
    assert out.shape == (1, B, 4), out.shape
    assert out.dtype == jnp.float32

    # Tight check against a reference that mirrors the kernel's bf16-operand matmuls,
    # plus a looser check against the pure-f32 torch-equivalent math (bf16 MXU drift).
    ref_bf16 = _reference_forward(x_ids, raw, bf16_matmul=True)
    ref_f32 = _reference_forward(x_ids, raw, bf16_matmul=False)
    assert jnp.allclose(out, ref_bf16, rtol=1e-3, atol=1e-3), (out, ref_bf16)
    assert jnp.allclose(out, ref_f32, rtol=5e-2, atol=5e-2), (out, ref_f32)

    print("KERNEL_OK")
</pallas_src>

<mosaic_0001>
module attributes {stable_mosaic.version = 11 : i64} {
  func.func @rnn_head_kernel(%arg0: memref<8x8xi32, #tpu.memory_space<vmem>>, %arg1: memref<424x128xf32, #tpu.memory_space<vmem>>, %arg2: memref<8x128xf32, #tpu.memory_space<vmem>>) attributes {dimension_semantics = [], scalar_prefetch = 0 : i64, scratch_operands = 0 : i64, tpu.core_type = #tpu.core_type<tc>} {
    %c0 = arith.constant 0 : index
    %c0_0 = arith.constant 0 : index
    %0 = vector.load %arg1[%c0, %c0_0] : memref<424x128xf32, #tpu.memory_space<vmem>>, vector<16x128xf32>
    %c16 = arith.constant 16 : index
    %c0_1 = arith.constant 0 : index
    %1 = vector.load %arg1[%c16, %c0_1] : memref<424x128xf32, #tpu.memory_space<vmem>>, vector<1x128xf32>
    %c24 = arith.constant 24 : index
    %c0_2 = arith.constant 0 : index
    %2 = vector.load %arg1[%c24, %c0_2] : memref<424x128xf32, #tpu.memory_space<vmem>>, vector<128x128xf32>
    %3 = arith.truncf %2 : vector<128x128xf32> to vector<128x128xbf16>
    %c152 = arith.constant 152 : index
    %c0_3 = arith.constant 0 : index
    %4 = vector.load %arg1[%c152, %c0_3] : memref<424x128xf32, #tpu.memory_space<vmem>>, vector<128x128xf32>
    %c280 = arith.constant 280 : index
    %c0_4 = arith.constant 0 : index
    %5 = vector.load %arg1[%c280, %c0_4] : memref<424x128xf32, #tpu.memory_space<vmem>>, vector<1x128xf32>
    %c288 = arith.constant 288 : index
    %c0_5 = arith.constant 0 : index
    %6 = vector.load %arg1[%c288, %c0_5] : memref<424x128xf32, #tpu.memory_space<vmem>>, vector<128x128xf32>
    %c416 = arith.constant 416 : index
    %c0_6 = arith.constant 0 : index
    %7 = vector.load %arg1[%c416, %c0_6] : memref<424x128xf32, #tpu.memory_space<vmem>>, vector<1x128xf32>
    %c0_7 = arith.constant 0 : index
    %c0_8 = arith.constant 0 : index
    %8 = vector.load %arg0[%c0_7, %c0_8] : memref<8x8xi32, #tpu.memory_space<vmem>>, vector<8x8xi32>
    %9 = tpu.iota {dimensions = array<i32: 1>} : vector<8x16xi32>
    %10 = vector.extract_strided_slice %8 {offsets = [0, 0], sizes = [8, 1], strides = [1, 1]} : vector<8x8xi32> to vector<8x1xi32>
    %11 = vector.broadcast %10 : vector<8x1xi32> to vector<8x16xi32>
    %12 = arith.cmpi eq, %9, %11 : vector<8x16xi32>
    %13 = arith.extui %12 : vector<8x16xi1> to vector<8x16xi32>
    %14 = arith.sitofp %13 : vector<8x16xi32> to vector<8x16xf32>
    %cst = arith.constant dense<0.000000e+00> : vector<8x128xf32>
    %15 = tpu.matmul %14, %0, %cst {dimension_numbers = #tpu.dot_dimension_numbers<[1], [0], [0], [1], [0, 0, 1, 1], [], []>} : vector<8x16xf32>, vector<16x128xf32>, vector<8x128xf32> -> vector<8x128xf32>
    %16 = vector.broadcast %1 : vector<1x128xf32> to vector<8x128xf32>
    %17 = arith.addf %15, %16 : vector<8x128xf32>
    %18 = vector.extract_strided_slice %8 {offsets = [0, 1], sizes = [8, 1], strides = [1, 1]} : vector<8x8xi32> to vector<8x1xi32>
    %19 = vector.broadcast %18 : vector<8x1xi32> to vector<8x16xi32>
    %20 = arith.cmpi eq, %9, %19 : vector<8x16xi32>
    %21 = arith.extui %20 : vector<8x16xi1> to vector<8x16xi32>
    %22 = arith.sitofp %21 : vector<8x16xi32> to vector<8x16xf32>
    %cst_9 = arith.constant dense<0.000000e+00> : vector<8x128xf32>
    %23 = tpu.matmul %22, %0, %cst_9 {dimension_numbers = #tpu.dot_dimension_numbers<[1], [0], [0], [1], [0, 0, 1, 1], [], []>} : vector<8x16xf32>, vector<16x128xf32>, vector<8x128xf32> -> vector<8x128xf32>
    %24 = vector.broadcast %1 : vector<1x128xf32> to vector<8x128xf32>
    %25 = arith.addf %23, %24 : vector<8x128xf32>
    %26 = vector.extract_strided_slice %8 {offsets = [0, 2], sizes = [8, 1], strides = [1, 1]} : vector<8x8xi32> to vector<8x1xi32>
    %27 = vector.broadcast %26 : vector<8x1xi32> to vector<8x16xi32>
    %28 = arith.cmpi eq, %9, %27 : vector<8x16xi32>
    %29 = arith.extui %28 : vector<8x16xi1> to vector<8x16xi32>
    %30 = arith.sitofp %29 : vector<8x16xi32> to vector<8x16xf32>
    %cst_10 = arith.constant dense<0.000000e+00> : vector<8x128xf32>
    %31 = tpu.matmul %30, %0, %cst_10 {dimension_numbers = #tpu.dot_dimension_numbers<[1], [0], [0], [1], [0, 0, 1, 1], [], []>} : vector<8x16xf32>, vector<16x128xf32>, vector<8x128xf32> -> vector<8x128xf32>
    %32 = vector.broadcast %1 : vector<1x128xf32> to vector<8x128xf32>
    %33 = arith.addf %31, %32 : vector<8x128xf32>
    %34 = vector.extract_strided_slice %8 {offsets = [0, 3], sizes = [8, 1], strides = [1, 1]} : vector<8x8xi32> to vector<8x1xi32>
    %35 = vector.broadcast %34 : vector<8x1xi32> to vector<8x16xi32>
    %36 = arith.cmpi eq, %9, %35 : vector<8x16xi32>
    %37 = arith.extui %36 : vector<8x16xi1> to vector<8x16xi32>
    %38 = arith.sitofp %37 : vector<8x16xi32> to vector<8x16xf32>
    %cst_11 = arith.constant dense<0.000000e+00> : vector<8x128xf32>
    %39 = tpu.matmul %38, %0, %cst_11 {dimension_numbers = #tpu.dot_dimension_numbers<[1], [0], [0], [1], [0, 0, 1, 1], [], []>} : vector<8x16xf32>, vector<16x128xf32>, vector<8x128xf32> -> vector<8x128xf32>
    %40 = vector.broadcast %1 : vector<1x128xf32> to vector<8x128xf32>
    %41 = arith.addf %39, %40 : vector<8x128xf32>
    %42 = vector.extract_strided_slice %8 {offsets = [0, 4], sizes = [8, 1], strides = [1, 1]} : vector<8x8xi32> to vector<8x1xi32>
    %43 = vector.broadcast %42 : vector<8x1xi32> to vector<8x16xi32>
    %44 = arith.cmpi eq, %9, %43 : vector<8x16xi32>
    %45 = arith.extui %44 : vector<8x16xi1> to vector<8x16xi32>
    %46 = arith.sitofp %45 : vector<8x16xi32> to vector<8x16xf32>
    %cst_12 = arith.constant dense<0.000000e+00> : vector<8x128xf32>
    %47 = tpu.matmul %46, %0, %cst_12 {dimension_numbers = #tpu.dot_dimension_numbers<[1], [0], [0], [1], [0, 0, 1, 1], [], []>} : vector<8x16xf32>, vector<16x128xf32>, vector<8x128xf32> -> vector<8x128xf32>
    %48 = vector.broadcast %1 : vector<1x128xf32> to vector<8x128xf32>
    %49 = arith.addf %47, %48 : vector<8x128xf32>
    %50 = vector.extract_strided_slice %8 {offsets = [0, 5], sizes = [8, 1], strides = [1, 1]} : vector<8x8xi32> to vector<8x1xi32>
    %51 = vector.broadcast %50 : vector<8x1xi32> to vector<8x16xi32>
    %52 = arith.cmpi eq, %9, %51 : vector<8x16xi32>
    %53 = arith.extui %52 : vector<8x16xi1> to vector<8x16xi32>
    %54 = arith.sitofp %53 : vector<8x16xi32> to vector<8x16xf32>
    %cst_13 = arith.constant dense<0.000000e+00> : vector<8x128xf32>
    %55 = tpu.matmul %54, %0, %cst_13 {dimension_numbers = #tpu.dot_dimension_numbers<[1], [0], [0], [1], [0, 0, 1, 1], [], []>} : vector<8x16xf32>, vector<16x128xf32>, vector<8x128xf32> -> vector<8x128xf32>
    %56 = vector.broadcast %1 : vector<1x128xf32> to vector<8x128xf32>
    %57 = arith.addf %55, %56 : vector<8x128xf32>
    %58 = vector.extract_strided_slice %8 {offsets = [0, 6], sizes = [8, 1], strides = [1, 1]} : vector<8x8xi32> to vector<8x1xi32>
    %59 = vector.broadcast %58 : vector<8x1xi32> to vector<8x16xi32>
    %60 = arith.cmpi eq, %9, %59 : vector<8x16xi32>
    %61 = arith.extui %60 : vector<8x16xi1> to vector<8x16xi32>
    %62 = arith.sitofp %61 : vector<8x16xi32> to vector<8x16xf32>
    %cst_14 = arith.constant dense<0.000000e+00> : vector<8x128xf32>
    %63 = tpu.matmul %62, %0, %cst_14 {dimension_numbers = #tpu.dot_dimension_numbers<[1], [0], [0], [1], [0, 0, 1, 1], [], []>} : vector<8x16xf32>, vector<16x128xf32>, vector<8x128xf32> -> vector<8x128xf32>
    %64 = vector.broadcast %1 : vector<1x128xf32> to vector<8x128xf32>
    %65 = arith.addf %63, %64 : vector<8x128xf32>
    %66 = vector.extract_strided_slice %8 {offsets = [0, 7], sizes = [8, 1], strides = [1, 1]} : vector<8x8xi32> to vector<8x1xi32>
    %67 = vector.broadcast %66 : vector<8x1xi32> to vector<8x16xi32>
    %68 = arith.cmpi eq, %9, %67 : vector<8x16xi32>
    %69 = arith.extui %68 : vector<8x16xi1> to vector<8x16xi32>
    %70 = arith.sitofp %69 : vector<8x16xi32> to vector<8x16xf32>
    %cst_15 = arith.constant dense<0.000000e+00> : vector<8x128xf32>
    %71 = tpu.matmul %70, %0, %cst_15 {dimension_numbers = #tpu.dot_dimension_numbers<[1], [0], [0], [1], [0, 0, 1, 1], [], []>} : vector<8x16xf32>, vector<16x128xf32>, vector<8x128xf32> -> vector<8x128xf32>
    %72 = vector.broadcast %1 : vector<1x128xf32> to vector<8x128xf32>
    %73 = arith.addf %71, %72 : vector<8x128xf32>
    %74 = math.tanh %17 : vector<8x128xf32>
    %75 = arith.truncf %74 : vector<8x128xf32> to vector<8x128xbf16>
    %cst_16 = arith.constant dense<0.000000e+00> : vector<8x128xf32>
    %76 = tpu.matmul %75, %3, %cst_16 {dimension_numbers = #tpu.dot_dimension_numbers<[1], [0], [0], [1], [0, 0, 1, 1], [], []>} : vector<8x128xbf16>, vector<128x128xbf16>, vector<8x128xf32> -> vector<8x128xf32>
    %77 = arith.addf %25, %76 : vector<8x128xf32>
    %78 = math.tanh %77 : vector<8x128xf32>
    %79 = arith.truncf %78 : vector<8x128xf32> to vector<8x128xbf16>
    %cst_17 = arith.constant dense<0.000000e+00> : vector<8x128xf32>
    %80 = tpu.matmul %79, %3, %cst_17 {dimension_numbers = #tpu.dot_dimension_numbers<[1], [0], [0], [1], [0, 0, 1, 1], [], []>} : vector<8x128xbf16>, vector<128x128xbf16>, vector<8x128xf32> -> vector<8x128xf32>
    %81 = arith.addf %33, %80 : vector<8x128xf32>
    %82 = math.tanh %81 : vector<8x128xf32>
    %83 = arith.truncf %82 : vector<8x128xf32> to vector<8x128xbf16>
    %cst_18 = arith.constant dense<0.000000e+00> : vector<8x128xf32>
    %84 = tpu.matmul %83, %3, %cst_18 {dimension_numbers = #tpu.dot_dimension_numbers<[1], [0], [0], [1], [0, 0, 1, 1], [], []>} : vector<8x128xbf16>, vector<128x128xbf16>, vector<8x128xf32> -> vector<8x128xf32>
    %85 = arith.addf %41, %84 : vector<8x128xf32>
    %86 = math.tanh %85 : vector<8x128xf32>
    %87 = arith.truncf %86 : vector<8x128xf32> to vector<8x128xbf16>
    %cst_19 = arith.constant dense<0.000000e+00> : vector<8x128xf32>
    %88 = tpu.matmul %87, %3, %cst_19 {dimension_numbers = #tpu.dot_dimension_numbers<[1], [0], [0], [1], [0, 0, 1, 1], [], []>} : vector<8x128xbf16>, vector<128x128xbf16>, vector<8x128xf32> -> vector<8x128xf32>
    %89 = arith.addf %49, %88 : vector<8x128xf32>
    %90 = math.tanh %89 : vector<8x128xf32>
    %91 = arith.truncf %90 : vector<8x128xf32> to vector<8x128xbf16>
    %cst_20 = arith.constant dense<0.000000e+00> : vector<8x128xf32>
    %92 = tpu.matmul %91, %3, %cst_20 {dimension_numbers = #tpu.dot_dimension_numbers<[1], [0], [0], [1], [0, 0, 1, 1], [], []>} : vector<8x128xbf16>, vector<128x128xbf16>, vector<8x128xf32> -> vector<8x128xf32>
    %93 = arith.addf %57, %92 : vector<8x128xf32>
    %94 = math.tanh %93 : vector<8x128xf32>
    %95 = arith.truncf %94 : vector<8x128xf32> to vector<8x128xbf16>
    %cst_21 = arith.constant dense<0.000000e+00> : vector<8x128xf32>
    %96 = tpu.matmul %95, %3, %cst_21 {dimension_numbers = #tpu.dot_dimension_numbers<[1], [0], [0], [1], [0, 0, 1, 1], [], []>} : vector<8x128xbf16>, vector<128x128xbf16>, vector<8x128xf32> -> vector<8x128xf32>
    %97 = arith.addf %65, %96 : vector<8x128xf32>
    %98 = math.tanh %97 : vector<8x128xf32>
    %99 = arith.truncf %98 : vector<8x128xf32> to vector<8x128xbf16>
    %cst_22 = arith.constant dense<0.000000e+00> : vector<8x128xf32>
    %100 = tpu.matmul %99, %3, %cst_22 {dimension_numbers = #tpu.dot_dimension_numbers<[1], [0], [0], [1], [0, 0, 1, 1], [], []>} : vector<8x128xbf16>, vector<128x128xbf16>, vector<8x128xf32> -> vector<8x128xf32>
    %101 = arith.addf %73, %100 : vector<8x128xf32>
    %102 = math.tanh %101 : vector<8x128xf32>
    %cst_23 = arith.constant dense<0.000000e+00> : vector<8x128xf32>
    %103 = tpu.matmul %102, %4, %cst_23 {dimension_numbers = #tpu.dot_dimension_numbers<[1], [0], [0], [1], [0, 0, 1, 1], [], []>} : vector<8x128xf32>, vector<128x128xf32>, vector<8x128xf32> -> vector<8x128xf32>
    %104 = vector.broadcast %5 : vector<1x128xf32> to vector<8x128xf32>
    %105 = arith.addf %103, %104 : vector<8x128xf32>
    %cst_24 = arith.constant 0.000000e+00 : f32
    %106 = vector.broadcast %cst_24 : f32 to vector<8x128xf32>
    %107 = arith.maximumf %105, %106 : vector<8x128xf32>
    %cst_25 = arith.constant dense<0.000000e+00> : vector<8x128xf32>
    %108 = tpu.matmul %107, %6, %cst_25 {dimension_numbers = #tpu.dot_dimension_numbers<[1], [0], [0], [1], [0, 0, 1, 1], [], []>} : vector<8x128xf32>, vector<128x128xf32>, vector<8x128xf32> -> vector<8x128xf32>
    %109 = vector.broadcast %7 : vector<1x128xf32> to vector<8x128xf32>
    %110 = arith.addf %108, %109 : vector<8x128xf32>
    %c0_26 = arith.constant 0 : index
    %c0_27 = arith.constant 0 : index
    %111 = vector.load %arg2[%c0_26, %c0_27] : memref<8x128xf32, #tpu.memory_space<vmem>>, vector<8x128xf32>
    tpu.vector_store %arg2[%c0_26, %c0_27], %110 {strides = array<i32>} : memref<8x128xf32, #tpu.memory_space<vmem>>, vector<8x128xf32>,
    return
  }
}

</mosaic_0001>

<llo_original>
// kernel: tpu_custom_call.1
$region0: #{tpu_custom_call.1}
  #allocation0 [shape = 'u32[]', space=smem, size = 0x4, offset = 0x4, fixed_abs, tag = 'smem constant byte address 0x4 - core index']
  #allocation1 [shape = 'u32[144,128]{1,0:T(1,128)}', space=vmem, size = 0x12000, scoped, tag = 'internal scratch']
  %s0 = inlined_call_operand.hbm [shape: s32[8,8], index: 0, kind: input, shape index: {}]
  %s1 = inlined_call_operand.hbm [shape: f32[424,128], index: 1, kind: input, shape index: {}]
  %s2 = inlined_call_operand.hbm [shape: f32[8,128], index: 2, kind: output, shape index: {}]
  %s3 = sld [smem:[#allocation0]]
  $region26: #{tpu_custom_call.1} parent=0
    _
  %s5 = ssub.s32 1, %s3
  %s6 = scalar_select 0, %s5, %s3
  $region1: #{tpu_custom_call.1} parent=0
    #allocation2 [shape = 'u8[4096]{0}', space=vmem, size = 0x1000, scoped, tag = 'input window, operand 0, single buffered']
    #allocation3 [shape = 's32[1]{0}', space=sflag, size = 0x4, scoped, tag = 'scoped memory for tpu_custom_call.1']
    #allocation4 [shape = 's32[1]{0}', space=sflag, size = 0x4, scoped, tag = 'scoped memory for tpu_custom_call.1']
    #allocation5 [shape = 'u8[217088]{0}', space=vmem, size = 0x35000, scoped, tag = 'input window, operand 1, single buffered']
    #allocation6 [shape = 's32[1]{0}', space=sflag, size = 0x4, scoped, tag = 'scoped memory for tpu_custom_call.1']
    #allocation7 [shape = 'u8[4096]{0}', space=vmem, size = 0x1000, scoped, tag = 'output window, operand 0, single buffered']
    %7 = vsyncpa [#allocation3], 0
    %8 = vsyncpa [#allocation6], 0
    %9 = vsyncpa [#allocation4], 0
    // Predicated region
    $region2: #{tpu_custom_call.1} parent=1 // pred_check
      _
    $region3: #{tpu_custom_call.1} parent=1 // pred_check_branch
      %11 = sbr.rel (0) target = $region5
    $region4: #{tpu_custom_call.1} parent=1 // pred_region
      %s13 = ssub.s32 128, 128
      %14 = vsyncadd [#allocation3], %s13
      %s16 = sshll.u32 [#allocation2], 4
      %s17 = int_to_ptr.vmem [resolvable:$true] %s16
      %19 = dma.hbm_to_vmem [thread:$0]  %s0, 128, %s17, [#allocation3]
    $region5: #{tpu_custom_call.1} parent=1 // pred_fallthru
      _
    // Predicated region
    $region6: #{tpu_custom_call.1} parent=1 // pred_check
      _
    $region7: #{tpu_custom_call.1} parent=1 // pred_check_branch
      %21 = sbr.rel (0) target = $region9
    $region8: #{tpu_custom_call.1} parent=1 // pred_region
      %s23 = ssub.s32 6784, 6784
      %24 = vsyncadd [#allocation6], %s23
      %s25 = sshll.u32 [#allocation5], 4
      %s26 = int_to_ptr.vmem [resolvable:$true] %s25
      %31 = dma.hbm_to_vmem [thread:$0]  %s1, 6784, %s26, [#allocation6], 128, 128, 8
    $region9: #{tpu_custom_call.1} parent=1 // pred_fallthru
      _
    // Predicated region
    $region10: #{tpu_custom_call.1} parent=1 // pred_check
      _
    $region11: #{tpu_custom_call.1} parent=1 // pred_check_branch
      %33 = sbr.rel (0) target = $region13
    $region12: #{tpu_custom_call.1} parent=1 // pred_region
      %34 = dma.done [#allocation3], 128
    $region13: #{tpu_custom_call.1} parent=1 // pred_fallthru
      _
    // Predicated region
    $region14: #{tpu_custom_call.1} parent=1 // pred_check
      _
    $region15: #{tpu_custom_call.1} parent=1 // pred_check_branch
      %36 = sbr.rel (0) target = $region17
    $region16: #{tpu_custom_call.1} parent=1 // pred_region
      %37 = dma.done [#allocation6], 6784
    $region17: #{tpu_custom_call.1} parent=1 // pred_fallthru
      _
    %v39 = vld [vmem:[#allocation5] sm:$0xff]
    %v40 = vld [vmem:[#allocation5 + $0x8] sm:$0xff]
    %v41 = vld [vmem:[#allocation5 + $0x10] sm:$0x1]
    %v42 = vld [vmem:[#allocation5 + $0x18] sm:$0xff]
    %v43 = vld [vmem:[#allocation5 + $0x20] sm:$0xff]
    %v44 = vld [vmem:[#allocation5 + $0x28] sm:$0xff]
    %v45 = vld [vmem:[#allocation5 + $0x30] sm:$0xff]
    %v46 = vld [vmem:[#allocation5 + $0x38] sm:$0xff]
    %v47 = vld [vmem:[#allocation5 + $0x40] sm:$0xff]
    %v48 = vld [vmem:[#allocation5 + $0x48] sm:$0xff]
    %v49 = vld [vmem:[#allocation5 + $0x50] sm:$0xff]
    %v50 = vld [vmem:[#allocation5 + $0x58] sm:$0xff]
    %v51 = vld [vmem:[#allocation5 + $0x60] sm:$0xff]
    %v52 = vld [vmem:[#allocation5 + $0x68] sm:$0xff]
    %v53 = vld [vmem:[#allocation5 + $0x70] sm:$0xff]
    %v54 = vld [vmem:[#allocation5 + $0x78] sm:$0xff]
    %v55 = vld [vmem:[#allocation5 + $0x80] sm:$0xff]
    %v56 = vld [vmem:[#allocation5 + $0x88] sm:$0xff]
    %v57 = vld [vmem:[#allocation5 + $0x90] sm:$0xff]
    %v58 = vpack.c.bf16 %v43, %v42
    %v59 = vpack.c.bf16 %v45, %v44
    %v60 = vpack.c.bf16 %v47, %v46
    %v61 = vpack.c.bf16 %v49, %v48
    %v62 = vpack.c.bf16 %v51, %v50
    %v63 = vpack.c.bf16 %v53, %v52
    %v64 = vpack.c.bf16 %v55, %v54
    %v65 = vpack.c.bf16 %v57, %v56
    %v66 = vld [vmem:[#allocation5 + $0x98] sm:$0xff]
    %v67 = vld [vmem:[#allocation5 + $0xa0] sm:$0xff]
    %v68 = vld [vmem:[#allocation5 + $0xa8] sm:$0xff]
    %v69 = vld [vmem:[#allocation5 + $0xb0] sm:$0xff]
    %v70 = vld [vmem:[#allocation5 + $0xb8] sm:$0xff]
    %v71 = vld [vmem:[#allocation5 + $0xc0] sm:$0xff]
    %v72 = vld [vmem:[#allocation5 + $0xc8] sm:$0xff]
    %v73 = vld [vmem:[#allocation5 + $0xd0] sm:$0xff]
    %v74 = vld [vmem:[#allocation5 + $0xd8] sm:$0xff]
    %v75 = vld [vmem:[#allocation5 + $0xe0] sm:$0xff]
    %v76 = vld [vmem:[#allocation5 + $0xe8] sm:$0xff]
    %v77 = vld [vmem:[#allocation5 + $0xf0] sm:$0xff]
    %v78 = vld [vmem:[#allocation5 + $0xf8] sm:$0xff]
    %v79 = vld [vmem:[#allocation5 + $0x100] sm:$0xff]
    %v80 = vld [vmem:[#allocation5 + $0x108] sm:$0xff]
    %v81 = vld [vmem:[#allocation5 + $0x110] sm:$0xff]
    %v82 = vld [vmem:[#allocation5 + $0x118] sm:$0x1]
    %v83 = vld [vmem:[#allocation5 + $0x120] sm:$0xff]
    %v84 = vld [vmem:[#allocation5 + $0x128] sm:$0xff]
    %v85 = vld [vmem:[#allocation5 + $0x130] sm:$0xff]
    %v86 = vld [vmem:[#allocation5 + $0x138] sm:$0xff]
    %v87 = vld [vmem:[#allocation5 + $0x140] sm:$0xff]
    %v88 = vld [vmem:[#allocation5 + $0x148] sm:$0xff]
    %v89 = vld [vmem:[#allocation5 + $0x150] sm:$0xff]
    %v90 = vld [vmem:[#allocation5 + $0x158] sm:$0xff]
    %v91 = vld [vmem:[#allocation5 + $0x160] sm:$0xff]
    %v92 = vld [vmem:[#allocation5 + $0x168] sm:$0xff]
    %v93 = vld [vmem:[#allocation5 + $0x170] sm:$0xff]
    %v94 = vld [vmem:[#allocation5 + $0x178] sm:$0xff]
    %v95 = vld [vmem:[#allocation5 + $0x180] sm:$0xff]
    %v96 = vld [vmem:[#allocation5 + $0x188] sm:$0xff]
    %v97 = vld [vmem:[#allocation5 + $0x190] sm:$0xff]
    %v98 = vld [vmem:[#allocation5 + $0x198] sm:$0xff]
    %v99 = vld [vmem:[#allocation5 + $0x1a0] sm:$0x1]
    %v100 = vld [vmem:[#allocation2] sm:$0xff]
    %v101 = vlaneseq
    %v102 = vand.u32 %v101, 127
    %103 = vset.pattern.permute.xlu0 0
    %104 = vperm.xlu0 %103, %v100
    %v105 = vpop.permute.xlu0 %104
    %vm106 = vcmp.eq.s32.totalorder %v102, %v105
    %v107 = vsel %vm106, 1, 0
    %v108 = vcvt.s32.f32 %v107
    %v109 = vlaneseq
    %v110 = vshrl.u32 %v109, 7
    %v111 = vsub.s32 0, %v110
    %v112 = vrot.slane %v41, %v111
    %vm113 = vcmask 130048
    %v115 = vsel %vm113, %v108, 0
    %117 = vmatprep.subr.mxu0 0.0
    %118 = vmatpush1.msra.mxu0 %v39
    %119 = vmatprep.subr.mxu0 0.0
    %120 = vmatpush1.msra.mxu0 %v40
    %121 = vmatprep.subr.mxu0 0.0
    %122 = vmatpush1.msra.mxu0 0.0
    %123 = vmatprep.subr.mxu0 0.0
    %124 = vmatpush1.msra.mxu0 0.0
    %125 = vmatprep.subr.mxu0 0.0
    %126 = vmatpush1.msra.mxu0 0.0
    %127 = vmatprep.subr.mxu0 0.0
    %128 = vmatpush1.msra.mxu0 0.0
    %129 = vmatprep.subr.mxu0 0.0
    %130 = vmatpush1.msra.mxu0 0.0
    %131 = vmatprep.subr.mxu0 0.0
    %132 = vmatpush1.msra.mxu0 0.0
    %133 = vmatprep.subr.mxu0 0.0
    %134 = vmatpush1.msra.mxu0 0.0
    %135 = vmatprep.subr.mxu0 0.0
    %136 = vmatpush1.msra.mxu0 0.0
    %137 = vmatprep.subr.mxu0 0.0
    %138 = vmatpush1.msra.mxu0 0.0
    %139 = vmatprep.subr.mxu0 0.0
    %140 = vmatpush1.msra.mxu0 0.0
    %141 = vmatprep.subr.mxu0 0.0
    %142 = vmatpush1.msra.mxu0 0.0
    %143 = vmatprep.subr.mxu0 0.0
    %144 = vmatpush1.msra.mxu0 0.0
    %145 = vmatprep.subr.mxu0 0.0
    %146 = vmatpush1.msra.mxu0 0.0
    %147 = vmatprep.subr.mxu0 0.0
    %148 = vmatpush1.msra.mxu0 0.0
    %149 = vmatprep.subr.mxu0 0.0
    %150 = vmatpush1.msra.mxu0 0.0
    %151 = vmatprep.subr.mxu0 0.0
    %152 = vmatpush1.msra.mxu0 0.0
    %153 = vmatprep.subr.mxu0 0.0
    %154 = vmatpush1.msra.mxu0 0.0
    %155 = vmatprep.subr.mxu0 0.0
    %156 = vmatpush1.msra.mxu0 0.0
    %157 = vmatprep.subr.mxu0 0.0
    %158 = vmatpush1.msra.mxu0 0.0
    %159 = vmatprep.subr.mxu0 0.0
    %160 = vmatpush1.msra.mxu0 0.0
    %161 = vmatprep.subr.mxu0 0.0
    %162 = vmatpush1.msra.mxu0 0.0
    %163 = vmatprep.subr.mxu0 0.0
    %164 = vmatpush1.msra.mxu0 0.0
    %165 = vmatprep.subr.mxu0 0.0
    %166 = vmatpush1.msra.mxu0 0.0
    %167 = vmatprep.subr.mxu0 0.0
    %168 = vmatpush1.msra.mxu0 0.0
    %169 = vmatprep.subr.mxu0 0.0
    %170 = vmatpush1.msra.mxu0 0.0
    %171 = vmatprep.subr.mxu0 0.0
    %172 = vmatpush1.msra.mxu0 0.0
    %173 = vmatprep.subr.mxu0 0.0
    %174 = vmatpush1.msra.mxu0 0.0
    %175 = vmatprep.subr.mxu0 0.0
    %176 = vmatpush1.msra.mxu0 0.0
    %177 = vmatprep.subr.mxu0 0.0
    %178 = vmatpush1.msra.mxu0 0.0
    %179 = vmatprep.subr.mxu0 0.0
    %180 = vmatpush1.msra.mxu0 0.0
    %181 = vmatprep.mubr.f32.mxu0 0.0
    %182 = vmatmul.mubr.f32.gmra.mrb[0].mxu0 %v115
    %v183 = vpop.f32.mrb[0].mxu0
    %v184 = vadd.f32 %v112, %v183
    %v185 = vpop.f32.mrb[0].mxu0
    %186 = vdwg.mxu0
    %187 = vset.pattern.permute.xlu0 1
    %188 = vperm.xlu0 %187, %v100
    %v189 = vpop.permute.xlu0 %188
    %vm190 = vcmp.eq.s32.totalorder %v102, %v189
    %v191 = vsel %vm190, 1, 0
    %v192 = vcvt.s32.f32 %v191
    %v194 = vsel %vm113, %v192, 0
    %196 = vmatprep.subr.mxu0 0.0
    %197 = vmatpush1.msra.mxu0 %v39
    %198 = vmatprep.subr.mxu0 0.0
    %199 = vmatpush1.msra.mxu0 %v40
    %200 = vmatprep.subr.mxu0 0.0
    %201 = vmatpush1.msra.mxu0 0.0
    %202 = vmatprep.subr.mxu0 0.0
    %203 = vmatpush1.msra.mxu0 0.0
    %204 = vmatprep.subr.mxu0 0.0
    %205 = vmatpush1.msra.mxu0 0.0
    %206 = vmatprep.subr.mxu0 0.0
    %207 = vmatpush1.msra.mxu0 0.0
    %208 = vmatprep.subr.mxu0 0.0
    %209 = vmatpush1.msra.mxu0 0.0
    %210 = vmatprep.subr.mxu0 0.0
    %211 = vmatpush1.msra.mxu0 0.0
    %212 = vmatprep.subr.mxu0 0.0
    %213 = vmatpush1.msra.mxu0 0.0
    %214 = vmatprep.subr.mxu0 0.0
    %215 = vmatpush1.msra.mxu0 0.0
    %216 = vmatprep.subr.mxu0 0.0
    %217 = vmatpush1.msra.mxu0 0.0
    %218 = vmatprep.subr.mxu0 0.0
    %219 = vmatpush1.msra.mxu0 0.0
    %220 = vmatprep.subr.mxu0 0.0
    %221 = vmatpush1.msra.mxu0 0.0
    %222 = vmatprep.subr.mxu0 0.0
    %223 = vmatpush1.msra.mxu0 0.0
    %224 = vmatprep.subr.mxu0 0.0
    %225 = vmatpush1.msra.mxu0 0.0
    %226 = vmatprep.subr.mxu0 0.0
    %227 = vmatpush1.msra.mxu0 0.0
    %228 = vmatprep.subr.mxu0 0.0
    %229 = vmatpush1.msra.mxu0 0.0
    %230 = vmatprep.subr.mxu0 0.0
    %231 = vmatpush1.msra.mxu0 0.0
    %232 = vmatprep.subr.mxu0 0.0
    %233 = vmatpush1.msra.mxu0 0.0
    %234 = vmatprep.subr.mxu0 0.0
    %235 = vmatpush1.msra.mxu0 0.0
    %236 = vmatprep.subr.mxu0 0.0
    %237 = vmatpush1.msra.mxu0 0.0
    %238 = vmatprep.subr.mxu0 0.0
    %239 = vmatpush1.msra.mxu0 0.0
    %240 = vmatprep.subr.mxu0 0.0
    %241 = vmatpush1.msra.mxu0 0.0
    %242 = vmatprep.subr.mxu0 0.0
    %243 = vmatpush1.msra.mxu0 0.0
    %244 = vmatprep.subr.mxu0 0.0
    %245 = vmatpush1.msra.mxu0 0.0
    %246 = vmatprep.subr.mxu0 0.0
    %247 = vmatpush1.msra.mxu0 0.0
    %248 = vmatprep.subr.mxu0 0.0
    %249 = vmatpush1.msra.mxu0 0.0
    %250 = vmatprep.subr.mxu0 0.0
    %251 = vmatpush1.msra.mxu0 0.0
    %252 = vmatprep.subr.mxu0 0.0
    %253 = vmatpush1.msra.mxu0 0.0
    %254 = vmatprep.subr.mxu0 0.0
    %255 = vmatpush1.msra.mxu0 0.0
    %256 = vmatprep.subr.mxu0 0.0
    %257 = vmatpush1.msra.mxu0 0.0
    %258 = vmatprep.subr.mxu0 0.0
    %259 = vmatpush1.msra.mxu0 0.0
    %260 = vmatprep.mubr.f32.mxu0 0.0
    %261 = vmatmul.mubr.f32.gmra.mrb[0].mxu0 %v194
    %v262 = vpop.f32.mrb[0].mxu0
    %v263 = vadd.f32 %v112, %v262
    %v264 = vpop.f32.mrb[0].mxu0
    %265 = vdwg.mxu0
    %266 = vset.pattern.permute.xlu0 2
    %267 = vperm.xlu0 %266, %v100
    %v268 = vpop.permute.xlu0 %267
    %vm269 = vcmp.eq.s32.totalorder %v102, %v268
    %v270 = vsel %vm269, 1, 0
    %v271 = vcvt.s32.f32 %v270
    %v273 = vsel %vm113, %v271, 0
    %275 = vmatprep.subr.mxu0 0.0
    %276 = vmatpush1.msra.mxu0 %v39
    %277 = vmatprep.subr.mxu0 0.0
    %278 = vmatpush1.msra.mxu0 %v40
    %279 = vmatprep.subr.mxu0 0.0
    %280 = vmatpush1.msra.mxu0 0.0
    %281 = vmatprep.subr.mxu0 0.0
    %282 = vmatpush1.msra.mxu0 0.0
    %283 = vmatprep.subr.mxu0 0.0
    %284 = vmatpush1.msra.mxu0 0.0
    %285 = vmatprep.subr.mxu0 0.0
    %286 = vmatpush1.msra.mxu0 0.0
    %287 = vmatprep.subr.mxu0 0.0
    %288 = vmatpush1.msra.mxu0 0.0
    %289 = vmatprep.subr.mxu0 0.0
    %290 = vmatpush1.msra.mxu0 0.0
    %291 = vmatprep.subr.mxu0 0.0
    %292 = vmatpush1.msra.mxu0 0.0
    %293 = vmatprep.subr.mxu0 0.0
    %294 = vmatpush1.msra.mxu0 0.0
    %295 = vmatprep.subr.mxu0 0.0
    %296 = vmatpush1.msra.mxu0 0.0
    %297 = vmatprep.subr.mxu0 0.0
    %298 = vmatpush1.msra.mxu0 0.0
    %299 = vmatprep.subr.mxu0 0.0
    %300 = vmatpush1.msra.mxu0 0.0
    %301 = vmatprep.subr.mxu0 0.0
    %302 = vmatpush1.msra.mxu0 0.0
    %303 = vmatprep.subr.mxu0 0.0
    %304 = vmatpush1.msra.mxu0 0.0
    %305 = vmatprep.subr.mxu0 0.0
    %306 = vmatpush1.msra.mxu0 0.0
    %307 = vmatprep.subr.mxu0 0.0
    %308 = vmatpush1.msra.mxu0 0.0
    %309 = vmatprep.subr.mxu0 0.0
    %310 = vmatpush1.msra.mxu0 0.0
    %311 = vmatprep.subr.mxu0 0.0
    %312 = vmatpush1.msra.mxu0 0.0
    %313 = vmatprep.subr.mxu0 0.0
    %314 = vmatpush1.msra.mxu0 0.0
    %315 = vmatprep.subr.mxu0 0.0
    %316 = vmatpush1.msra.mxu0 0.0
    %317 = vmatprep.subr.mxu0 0.0
    %318 = vmatpush1.msra.mxu0 0.0
    %319 = vmatprep.subr.mxu0 0.0
    %320 = vmatpush1.msra.mxu0 0.0
    %321 = vmatprep.subr.mxu0 0.0
    %322 = vmatpush1.msra.mxu0 0.0
    %323 = vmatprep.subr.mxu0 0.0
    %324 = vmatpush1.msra.mxu0 0.0
    %325 = vmatprep.subr.mxu0 0.0
    %326 = vmatpush1.msra.mxu0 0.0
    %327 = vmatprep.subr.mxu0 0.0
    %328 = vmatpush1.msra.mxu0 0.0
    %329 = vmatprep.subr.mxu0 0.0
    %330 = vmatpush1.msra.mxu0 0.0
    %331 = vmatprep.subr.mxu0 0.0
    %332 = vmatpush1.msra.mxu0 0.0
    %333 = vmatprep.subr.mxu0 0.0
    %334 = vmatpush1.msra.mxu0 0.0
    %335 = vmatprep.subr.mxu0 0.0
    %336 = vmatpush1.msra.mxu0 0.0
    %337 = vmatprep.subr.mxu0 0.0
    %338 = vmatpush1.msra.mxu0 0.0
    %339 = vmatprep.mubr.f32.mxu0 0.0
    %340 = vmatmul.mubr.f32.gmra.mrb[0].mxu0 %v273
    %v341 = vpop.f32.mrb[0].mxu0
    %v342 = vadd.f32 %v112, %v341
    %v343 = vpop.f32.mrb[0].mxu0
    %344 = vdwg.mxu0
    %345 = vset.pattern.permute.xlu0 3
    %346 = vperm.xlu0 %345, %v100
    %v347 = vpop.permute.xlu0 %346
    %vm348 = vcmp.eq.s32.totalorder %v102, %v347
    %v349 = vsel %vm348, 1, 0
    %v350 = vcvt.s32.f32 %v349
    %v352 = vsel %vm113, %v350, 0
    %354 = vmatprep.subr.mxu0 0.0
    %355 = vmatpush1.msra.mxu0 %v39
    %356 = vmatprep.subr.mxu0 0.0
    %357 = vmatpush1.msra.mxu0 %v40
    %358 = vmatprep.subr.mxu0 0.0
    %359 = vmatpush1.msra.mxu0 0.0
    %360 = vmatprep.subr.mxu0 0.0
    %361 = vmatpush1.msra.mxu0 0.0
    %362 = vmatprep.subr.mxu0 0.0
    %363 = vmatpush1.msra.mxu0 0.0
    %364 = vmatprep.subr.mxu0 0.0
    %365 = vmatpush1.msra.mxu0 0.0
    %366 = vmatprep.subr.mxu0 0.0
    %367 = vmatpush1.msra.mxu0 0.0
    %368 = vmatprep.subr.mxu0 0.0
    %369 = vmatpush1.msra.mxu0 0.0
    %370 = vmatprep.subr.mxu0 0.0
    %371 = vmatpush1.msra.mxu0 0.0
    %372 = vmatprep.subr.mxu0 0.0
    %373 = vmatpush1.msra.mxu0 0.0
    %374 = vmatprep.subr.mxu0 0.0
    %375 = vmatpush1.msra.mxu0 0.0
    %376 = vmatprep.subr.mxu0 0.0
    %377 = vmatpush1.msra.mxu0 0.0
    %378 = vmatprep.subr.mxu0 0.0
    %379 = vmatpush1.msra.mxu0 0.0
    %380 = vmatprep.subr.mxu0 0.0
    %381 = vmatpush1.msra.mxu0 0.0
    %382 = vmatprep.subr.mxu0 0.0
    %383 = vmatpush1.msra.mxu0 0.0
    %384 = vmatprep.subr.mxu0 0.0
    %385 = vmatpush1.msra.mxu0 0.0
    %386 = vmatprep.subr.mxu0 0.0
    %387 = vmatpush1.msra.mxu0 0.0
    %388 = vmatprep.subr.mxu0 0.0
    %389 = vmatpush1.msra.mxu0 0.0
    %390 = vmatprep.subr.mxu0 0.0
    %391 = vmatpush1.msra.mxu0 0.0
    %392 = vmatprep.subr.mxu0 0.0
    %393 = vmatpush1.msra.mxu0 0.0
    %394 = vmatprep.subr.mxu0 0.0
    %395 = vmatpush1.msra.mxu0 0.0
    %396 = vmatprep.subr.mxu0 0.0
    %397 = vmatpush1.msra.mxu0 0.0
    %398 = vmatprep.subr.mxu0 0.0
    %399 = vmatpush1.msra.mxu0 0.0
    %400 = vmatprep.subr.mxu0 0.0
    %401 = vmatpush1.msra.mxu0 0.0
    %402 = vmatprep.subr.mxu0 0.0
    %403 = vmatpush1.msra.mxu0 0.0
    %404 = vmatprep.subr.mxu0 0.0
    %405 = vmatpush1.msra.mxu0 0.0
    %406 = vmatprep.subr.mxu0 0.0
    %407 = vmatpush1.msra.mxu0 0.0
    %408 = vmatprep.subr.mxu0 0.0
    %409 = vmatpush1.msra.mxu0 0.0
    %410 = vmatprep.subr.mxu0 0.0
    %411 = vmatpush1.msra.mxu0 0.0
    %412 = vmatprep.subr.mxu0 0.0
    %413 = vmatpush1.msra.mxu0 0.0
    %414 = vmatprep.subr.mxu0 0.0
    %415 = vmatpush1.msra.mxu0 0.0
    %416 = vmatprep.subr.mxu0 0.0
    %417 = vmatpush1.msra.mxu0 0.0
    %418 = vmatprep.mubr.f32.mxu0 0.0
    %419 = vmatmul.mubr.f32.gmra.mrb[0].mxu0 %v352
    %v420 = vpop.f32.mrb[0].mxu0
    %v421 = vadd.f32 %v112, %v420
    %v422 = vpop.f32.mrb[0].mxu0
    %423 = vdwg.mxu0
    %424 = vset.pattern.permute.xlu0 4
    %425 = vperm.xlu0 %424, %v100
    %v426 = vpop.permute.xlu0 %425
    %vm427 = vcmp.eq.s32.totalorder %v102, %v426
    %v428 = vsel %vm427, 1, 0
    %v429 = vcvt.s32.f32 %v428
    %v431 = vsel %vm113, %v429, 0
    %433 = vmatprep.subr.mxu0 0.0
    %434 = vmatpush1.msra.mxu0 %v39
    %435 = vmatprep.subr.mxu0 0.0
    %436 = vmatpush1.msra.mxu0 %v40
    %437 = vmatprep.subr.mxu0 0.0
    %438 = vmatpush1.msra.mxu0 0.0
    %439 = vmatprep.subr.mxu0 0.0
    %440 = vmatpush1.msra.mxu0 0.0
    %441 = vmatprep.subr.mxu0 0.0
    %442 = vmatpush1.msra.mxu0 0.0
    %443 = vmatprep.subr.mxu0 0.0
    %444 = vmatpush1.msra.mxu0 0.0
    %445 = vmatprep.subr.mxu0 0.0
    %446 = vmatpush1.msra.mxu0 0.0
    %447 = vmatprep.subr.mxu0 0.0
    %448 = vmatpush1.msra.mxu0 0.0
    %449 = vmatprep.subr.mxu0 0.0
    %450 = vmatpush1.msra.mxu0 0.0
    %451 = vmatprep.subr.mxu0 0.0
    %452 = vmatpush1.msra.mxu0 0.0
    %453 = vmatprep.subr.mxu0 0.0
    %454 = vmatpush1.msra.mxu0 0.0
    %455 = vmatprep.subr.mxu0 0.0
    %456 = vmatpush1.msra.mxu0 0.0
    %457 = vmatprep.subr.mxu0 0.0
    %458 = vmatpush1.msra.mxu0 0.0
    %459 = vmatprep.subr.mxu0 0.0
    %460 = vmatpush1.msra.mxu0 0.0
    %461 = vmatprep.subr.mxu0 0.0
    %462 = vmatpush1.msra.mxu0 0.0
    %463 = vmatprep.subr.mxu0 0.0
    %464 = vmatpush1.msra.mxu0 0.0
    %465 = vmatprep.subr.mxu0 0.0
    %466 = vmatpush1.msra.mxu0 0.0
    %467 = vmatprep.subr.mxu0 0.0
    %468 = vmatpush1.msra.mxu0 0.0
    %469 = vmatprep.subr.mxu0 0.0
    %470 = vmatpush1.msra.mxu0 0.0
    %471 = vmatprep.subr.mxu0 0.0
    %472 = vmatpush1.msra.mxu0 0.0
    %473 = vmatprep.subr.mxu0 0.0
    %474 = vmatpush1.msra.mxu0 0.0
    %475 = vmatprep.subr.mxu0 0.0
    %476 = vmatpush1.msra.mxu0 0.0
    %477 = vmatprep.subr.mxu0 0.0
    %478 = vmatpush1.msra.mxu0 0.0
    %479 = vmatprep.subr.mxu0 0.0
    %480 = vmatpush1.msra.mxu0 0.0
    %481 = vmatprep.subr.mxu0 0.0
    %482 = vmatpush1.msra.mxu0 0.0
    %483 = vmatprep.subr.mxu0 0.0
    %484 = vmatpush1.msra.mxu0 0.0
    %485 = vmatprep.subr.mxu0 0.0
    %486 = vmatpush1.msra.mxu0 0.0
    %487 = vmatprep.subr.mxu0 0.0
    %488 = vmatpush1.msra.mxu0 0.0
    %489 = vmatprep.subr.mxu0 0.0
    %490 = vmatpush1.msra.mxu0 0.0
    %491 = vmatprep.subr.mxu0 0.0
    %492 = vmatpush1.msra.mxu0 0.0
    %493 = vmatprep.subr.mxu0 0.0
    %494 = vmatpush1.msra.mxu0 0.0
    %495 = vmatprep.subr.mxu0 0.0
    %496 = vmatpush1.msra.mxu0 0.0
    %497 = vmatprep.mubr.f32.mxu0 0.0
    %498 = vmatmul.mubr.f32.gmra.mrb[0].mxu0 %v431
    %v499 = vpop.f32.mrb[0].mxu0
    %v500 = vadd.f32 %v112, %v499
    %v501 = vpop.f32.mrb[0].mxu0
    %502 = vdwg.mxu0
    %503 = vset.pattern.permute.xlu0 5
    %504 = vperm.xlu0 %503, %v100
    %v505 = vpop.permute.xlu0 %504
    %vm506 = vcmp.eq.s32.totalorder %v102, %v505
    %v507 = vsel %vm506, 1, 0
    %v508 = vcvt.s32.f32 %v507
    %v510 = vsel %vm113, %v508, 0
    %512 = vmatprep.subr.mxu0 0.0
    %513 = vmatpush1.msra.mxu0 %v39
    %514 = vmatprep.subr.mxu0 0.0
    %515 = vmatpush1.msra.mxu0 %v40
    %516 = vmatprep.subr.mxu0 0.0
    %517 = vmatpush1.msra.mxu0 0.0
    %518 = vmatprep.subr.mxu0 0.0
    %519 = vmatpush1.msra.mxu0 0.0
    %520 = vmatprep.subr.mxu0 0.0
    %521 = vmatpush1.msra.mxu0 0.0
    %522 = vmatprep.subr.mxu0 0.0
    %523 = vmatpush1.msra.mxu0 0.0
    %524 = vmatprep.subr.mxu0 0.0
    %525 = vmatpush1.msra.mxu0 0.0
    %526 = vmatprep.subr.mxu0 0.0
    %527 = vmatpush1.msra.mxu0 0.0
    %528 = vmatprep.subr.mxu0 0.0
    %529 = vmatpush1.msra.mxu0 0.0
    %530 = vmatprep.subr.mxu0 0.0
    %531 = vmatpush1.msra.mxu0 0.0
    %532 = vmatprep.subr.mxu0 0.0
    %533 = vmatpush1.msra.mxu0 0.0
    %534 = vmatprep.subr.mxu0 0.0
    %535 = vmatpush1.msra.mxu0 0.0
    %536 = vmatprep.subr.mxu0 0.0
    %537 = vmatpush1.msra.mxu0 0.0
    %538 = vmatprep.subr.mxu0 0.0
    %539 = vmatpush1.msra.mxu0 0.0
    %540 = vmatprep.subr.mxu0 0.0
    %541 = vmatpush1.msra.mxu0 0.0
    %542 = vmatprep.subr.mxu0 0.0
    %543 = vmatpush1.msra.mxu0 0.0
    %544 = vmatprep.subr.mxu0 0.0
    %545 = vmatpush1.msra.mxu0 0.0
    %546 = vmatprep.subr.mxu0 0.0
    %547 = vmatpush1.msra.mxu0 0.0
    %548 = vmatprep.subr.mxu0 0.0
    %549 = vmatpush1.msra.mxu0 0.0
    %550 = vmatprep.subr.mxu0 0.0
    %551 = vmatpush1.msra.mxu0 0.0
    %552 = vmatprep.subr.mxu0 0.0
    %553 = vmatpush1.msra.mxu0 0.0
    %554 = vmatprep.subr.mxu0 0.0
    %555 = vmatpush1.msra.mxu0 0.0
    %556 = vmatprep.subr.mxu0 0.0
    %557 = vmatpush1.msra.mxu0 0.0
    %558 = vmatprep.subr.mxu0 0.0
    %559 = vmatpush1.msra.mxu0 0.0
    %560 = vmatprep.subr.mxu0 0.0
    %561 = vmatpush1.msra.mxu0 0.0
    %562 = vmatprep.subr.mxu0 0.0
    %563 = vmatpush1.msra.mxu0 0.0
    %564 = vmatprep.subr.mxu0 0.0
    %565 = vmatpush1.msra.mxu0 0.0
    %566 = vmatprep.subr.mxu0 0.0
    %567 = vmatpush1.msra.mxu0 0.0
    %568 = vmatprep.subr.mxu0 0.0
    %569 = vmatpush1.msra.mxu0 0.0
    %570 = vmatprep.subr.mxu0 0.0
    %571 = vmatpush1.msra.mxu0 0.0
    %572 = vmatprep.subr.mxu0 0.0
    %573 = vmatpush1.msra.mxu0 0.0
    %574 = vmatprep.subr.mxu0 0.0
    %575 = vmatpush1.msra.mxu0 0.0
    %576 = vmatprep.mubr.f32.mxu0 0.0
    %577 = vmatmul.mubr.f32.gmra.mrb[0].mxu0 %v510
    %v578 = vpop.f32.mrb[0].mxu0
    %v579 = vadd.f32 %v112, %v578
    %v580 = vpop.f32.mrb[0].mxu0
    %581 = vdwg.mxu0
    %582 = vset.pattern.permute.xlu0 6
    %583 = vperm.xlu0 %582, %v100
    %v584 = vpop.permute.xlu0 %583
    %vm585 = vcmp.eq.s32.totalorder %v102, %v584
    %v586 = vsel %vm585, 1, 0
    %v587 = vcvt.s32.f32 %v586
    %v589 = vsel %vm113, %v587, 0
    %591 = vmatprep.subr.mxu0 0.0
    %592 = vmatpush1.msra.mxu0 %v39
    %593 = vmatprep.subr.mxu0 0.0
    %594 = vmatpush1.msra.mxu0 %v40
    %595 = vmatprep.subr.mxu0 0.0
    %596 = vmatpush1.msra.mxu0 0.0
    %597 = vmatprep.subr.mxu0 0.0
    %598 = vmatpush1.msra.mxu0 0.0
    %599 = vmatprep.subr.mxu0 0.0
    %600 = vmatpush1.msra.mxu0 0.0
    %601 = vmatprep.subr.mxu0 0.0
    %602 = vmatpush1.msra.mxu0 0.0
    %603 = vmatprep.subr.mxu0 0.0
    %604 = vmatpush1.msra.mxu0 0.0
    %605 = vmatprep.subr.mxu0 0.0
    %606 = vmatpush1.msra.mxu0 0.0
    %607 = vmatprep.subr.mxu0 0.0
    %608 = vmatpush1.msra.mxu0 0.0
    %609 = vmatprep.subr.mxu0 0.0
    %610 = vmatpush1.msra.mxu0 0.0
    %611 = vmatprep.subr.mxu0 0.0
    %612 = vmatpush1.msra.mxu0 0.0
    %613 = vmatprep.subr.mxu0 0.0
    %614 = vmatpush1.msra.mxu0 0.0
    %615 = vmatprep.subr.mxu0 0.0
    %616 = vmatpush1.msra.mxu0 0.0
    %617 = vmatprep.subr.mxu0 0.0
    %618 = vmatpush1.msra.mxu0 0.0
    %619 = vmatprep.subr.mxu0 0.0
    %620 = vmatpush1.msra.mxu0 0.0
    %621 = vmatprep.subr.mxu0 0.0
    %622 = vmatpush1.msra.mxu0 0.0
    %623 = vmatprep.subr.mxu0 0.0
    %624 = vmatpush1.msra.mxu0 0.0
    %625 = vmatprep.subr.mxu0 0.0
    %626 = vmatpush1.msra.mxu0 0.0
    %627 = vmatprep.subr.mxu0 0.0
    %628 = vmatpush1.msra.mxu0 0.0
    %629 = vmatprep.subr.mxu0 0.0
    %630 = vmatpush1.msra.mxu0 0.0
    %631 = vmatprep.subr.mxu0 0.0
    %632 = vmatpush1.msra.mxu0 0.0
    %633 = vmatprep.subr.mxu0 0.0
    %634 = vmatpush1.msra.mxu0 0.0
    %635 = vmatprep.subr.mxu0 0.0
    %636 = vmatpush1.msra.mxu0 0.0
    %637 = vmatprep.subr.mxu0 0.0
    %638 = vmatpush1.msra.mxu0 0.0
    %639 = vmatprep.subr.mxu0 0.0
    %640 = vmatpush1.msra.mxu0 0.0
    %641 = vmatprep.subr.mxu0 0.0
    %642 = vmatpush1.msra.mxu0 0.0
    %643 = vmatprep.subr.mxu0 0.0
    %644 = vmatpush1.msra.mxu0 0.0
    %645 = vmatprep.subr.mxu0 0.0
    %646 = vmatpush1.msra.mxu0 0.0
    %647 = vmatprep.subr.mxu0 0.0
    %648 = vmatpush1.msra.mxu0 0.0
    %649 = vmatprep.subr.mxu0 0.0
    %650 = vmatpush1.msra.mxu0 0.0
    %651 = vmatprep.subr.mxu0 0.0
    %652 = vmatpush1.msra.mxu0 0.0
    %653 = vmatprep.subr.mxu0 0.0
    %654 = vmatpush1.msra.mxu0 0.0
    %655 = vmatprep.mubr.f32.mxu0 0.0
    %656 = vmatmul.mubr.f32.gmra.mrb[0].mxu0 %v589
    %v657 = vpop.f32.mrb[0].mxu0
    %v658 = vadd.f32 %v112, %v657
    %v659 = vpop.f32.mrb[0].mxu0
    %660 = vdwg.mxu0
    %661 = vset.pattern.permute.xlu0 7
    %662 = vperm.xlu0 %661, %v100
    %v663 = vpop.permute.xlu0 %662
    %vm664 = vcmp.eq.s32.totalorder %v102, %v663
    %v665 = vsel %vm664, 1, 0
    %v666 = vcvt.s32.f32 %v665
    %v668 = vsel %vm113, %v666, 0
    %670 = vmatprep.subr.mxu0 0.0
    %671 = vmatpush1.msra.mxu0 %v39
    %672 = vmatprep.subr.mxu0 0.0
    %673 = vmatpush1.msra.mxu0 %v40
    %674 = vmatprep.subr.mxu0 0.0
    %675 = vmatpush1.msra.mxu0 0.0
    %676 = vmatprep.subr.mxu0 0.0
    %677 = vmatpush1.msra.mxu0 0.0
    %678 = vmatprep.subr.mxu0 0.0
    %679 = vmatpush1.msra.mxu0 0.0
    %680 = vmatprep.subr.mxu0 0.0
    %681 = vmatpush1.msra.mxu0 0.0
    %682 = vmatprep.subr.mxu0 0.0
    %683 = vmatpush1.msra.mxu0 0.0
    %684 = vmatprep.subr.mxu0 0.0
    %685 = vmatpush1.msra.mxu0 0.0
    %686 = vmatprep.subr.mxu0 0.0
    %687 = vmatpush1.msra.mxu0 0.0
    %688 = vmatprep.subr.mxu0 0.0
    %689 = vmatpush1.msra.mxu0 0.0
    %690 = vmatprep.subr.mxu0 0.0
    %691 = vmatpush1.msra.mxu0 0.0
    %692 = vmatprep.subr.mxu0 0.0
    %693 = vmatpush1.msra.mxu0 0.0
    %694 = vmatprep.subr.mxu0 0.0
    %695 = vmatpush1.msra.mxu0 0.0
    %696 = vmatprep.subr.mxu0 0.0
    %697 = vmatpush1.msra.mxu0 0.0
    %698 = vmatprep.subr.mxu0 0.0
    %699 = vmatpush1.msra.mxu0 0.0
    %700 = vmatprep.subr.mxu0 0.0
    %701 = vmatpush1.msra.mxu0 0.0
    %702 = vmatprep.subr.mxu0 0.0
    %703 = vmatpush1.msra.mxu0 0.0
    %704 = vmatprep.subr.mxu0 0.0
    %705 = vmatpush1.msra.mxu0 0.0
    %706 = vmatprep.subr.mxu0 0.0
    %707 = vmatpush1.msra.mxu0 0.0
    %708 = vmatprep.subr.mxu0 0.0
    %709 = vmatpush1.msra.mxu0 0.0
    %710 = vmatprep.subr.mxu0 0.0
    %711 = vmatpush1.msra.mxu0 0.0
    %712 = vmatprep.subr.mxu0 0.0
    %713 = vmatpush1.msra.mxu0 0.0
    %714 = vmatprep.subr.mxu0 0.0
    %715 = vmatpush1.msra.mxu0 0.0
    %716 = vmatprep.subr.mxu0 0.0
    %717 = vmatpush1.msra.mxu0 0.0
    %718 = vmatprep.subr.mxu0 0.0
    %719 = vmatpush1.msra.mxu0 0.0
    %720 = vmatprep.subr.mxu0 0.0
    %721 = vmatpush1.msra.mxu0 0.0
    %722 = vmatprep.subr.mxu0 0.0
    %723 = vmatpush1.msra.mxu0 0.0
    %724 = vmatprep.subr.mxu0 0.0
    %725 = vmatpush1.msra.mxu0 0.0
    %726 = vmatprep.subr.mxu0 0.0
    %727 = vmatpush1.msra.mxu0 0.0
    %728 = vmatprep.subr.mxu0 0.0
    %729 = vmatpush1.msra.mxu0 0.0
    %730 = vmatprep.subr.mxu0 0.0
    %731 = vmatpush1.msra.mxu0 0.0
    %732 = vmatprep.subr.mxu0 0.0
    %733 = vmatpush1.msra.mxu0 0.0
    %734 = vmatprep.mubr.f32.mxu0 0.0
    %735 = vmatmul.mubr.f32.gmra.mrb[0].mxu0 %v668
    %v736 = vpop.f32.mrb[0].mxu0
    %v737 = vadd.f32 %v112, %v736
    %v738 = vpop.f32.mrb[0].mxu0
    %739 = vdwg.mxu0
    %v740 = vtanh.pop %v184
    %v741 = vpack.c.bf16 %v740, %v740
    %742 = vmatprep.subr.bf16.mxu0 0
    %743 = vmatpush1.bf16.msra.mxu0 %v58
    %744 = vmatprep.subr.bf16.mxu0 0
    %745 = vmatpush1.bf16.msra.mxu0 %v59
    %746 = vmatprep.subr.bf16.mxu0 0
    %747 = vmatpush1.bf16.msra.mxu0 %v60
    %748 = vmatprep.subr.bf16.mxu0 0
    %749 = vmatpush1.bf16.msra.mxu0 %v61
    %750 = vmatprep.subr.bf16.mxu0 0
    %751 = vmatpush1.bf16.msra.mxu0 %v62
    %752 = vmatprep.subr.bf16.mxu0 0
    %753 = vmatpush1.bf16.msra.mxu0 %v63
    %754 = vmatprep.subr.bf16.mxu0 0
    %755 = vmatpush1.bf16.msra.mxu0 %v64
    %756 = vmatprep.subr.bf16.mxu0 0
    %757 = vmatpush1.bf16.msra.mxu0 %v65
    %758 = vmatprep.subr.bf16.mxu0 0
    %759 = vmatpush1.bf16.msra.mxu0 0
    %760 = vmatprep.subr.bf16.mxu0 0
    %761 = vmatpush1.bf16.msra.mxu0 0
    %762 = vmatprep.subr.bf16.mxu0 0
    %763 = vmatpush1.bf16.msra.mxu0 0
    %764 = vmatprep.subr.bf16.mxu0 0
    %765 = vmatpush1.bf16.msra.mxu0 0
    %766 = vmatprep.subr.bf16.mxu0 0
    %767 = vmatpush1.bf16.msra.mxu0 0
    %768 = vmatprep.subr.bf16.mxu0 0
    %769 = vmatpush1.bf16.msra.mxu0 0
    %770 = vmatprep.subr.bf16.mxu0 0
    %771 = vmatpush1.bf16.msra.mxu0 0
    %772 = vmatprep.subr.bf16.mxu0 0
    %773 = vmatpush1.bf16.msra.mxu0 0
    %774 = vmatprep.mubr.bf16.mxu0 0
    %775 = vmatmul.mubr.bf16.gmra.mrb[0].mxu0 %v741
    %v776 = vpop.f32.mrb[0].mxu0
    %v777 = vadd.f32 0.0, %v776
    %v778 = vpop.f32.mrb[0].mxu0
    %v779 = vpop.f32.mrb[0].mxu0
    %v780 = vpop.f32.mrb[0].mxu0
    %781 = vdwg.mxu0
    %v782 = vadd.f32 %v263, %v777
    %v783 = vtanh.pop %v782
    %v784 = vpack.c.bf16 %v783, %v783
    %785 = vmatprep.subr.bf16.mxu0 0
    %786 = vmatpush1.bf16.msra.mxu0 %v58
    %787 = vmatprep.subr.bf16.mxu0 0
    %788 = vmatpush1.bf16.msra.mxu0 %v59
    %789 = vmatprep.subr.bf16.mxu0 0
    %790 = vmatpush1.bf16.msra.mxu0 %v60
    %791 = vmatprep.subr.bf16.mxu0 0
    %792 = vmatpush1.bf16.msra.mxu0 %v61
    %793 = vmatprep.subr.bf16.mxu0 0
    %794 = vmatpush1.bf16.msra.mxu0 %v62
    %795 = vmatprep.subr.bf16.mxu0 0
    %796 = vmatpush1.bf16.msra.mxu0 %v63
    %797 = vmatprep.subr.bf16.mxu0 0
    %798 = vmatpush1.bf16.msra.mxu0 %v64
    %799 = vmatprep.subr.bf16.mxu0 0
    %800 = vmatpush1.bf16.msra.mxu0 %v65
    %801 = vmatprep.subr.bf16.mxu0 0
    %802 = vmatpush1.bf16.msra.mxu0 0
    %803 = vmatprep.subr.bf16.mxu0 0
    %804 = vmatpush1.bf16.msra.mxu0 0
    %805 = vmatprep.subr.bf16.mxu0 0
    %806 = vmatpush1.bf16.msra.mxu0 0
    %807 = vmatprep.subr.bf16.mxu0 0
    %808 = vmatpush1.bf16.msra.mxu0 0
    %809 = vmatprep.subr.bf16.mxu0 0
    %810 = vmatpush1.bf16.msra.mxu0 0
    %811 = vmatprep.subr.bf16.mxu0 0
    %812 = vmatpush1.bf16.msra.mxu0 0
    %813 = vmatprep.subr.bf16.mxu0 0
    %814 = vmatpush1.bf16.msra.mxu0 0
    %815 = vmatprep.subr.bf16.mxu0 0
    %816 = vmatpush1.bf16.msra.mxu0 0
    %817 = vmatprep.mubr.bf16.mxu0 0
    %818 = vmatmul.mubr.bf16.gmra.mrb[0].mxu0 %v784
    %v819 = vpop.f32.mrb[0].mxu0
    %v820 = vadd.f32 0.0, %v819
    %v821 = vpop.f32.mrb[0].mxu0
    %v822 = vpop.f32.mrb[0].mxu0
    %v823 = vpop.f32.mrb[0].mxu0
    %824 = vdwg.mxu0
    %v825 = vadd.f32 %v342, %v820
    %v826 = vtanh.pop %v825
    %v827 = vpack.c.bf16 %v826, %v826
    %828 = vmatprep.subr.bf16.mxu0 0
    %829 = vmatpush1.bf16.msra.mxu0 %v58
    %830 = vmatprep.subr.bf16.mxu0 0
    %831 = vmatpush1.bf16.msra.mxu0 %v59
    %832 = vmatprep.subr.bf16.mxu0 0
    %833 = vmatpush1.bf16.msra.mxu0 %v60
    %834 = vmatprep.subr.bf16.mxu0 0
    %835 = vmatpush1.bf16.msra.mxu0 %v61
    %836 = vmatprep.subr.bf16.mxu0 0
    %837 = vmatpush1.bf16.msra.mxu0 %v62
    %838 = vmatprep.subr.bf16.mxu0 0
    %839 = vmatpush1.bf16.msra.mxu0 %v63
    %840 = vmatprep.subr.bf16.mxu0 0
    %841 = vmatpush1.bf16.msra.mxu0 %v64
    %842 = vmatprep.subr.bf16.mxu0 0
    %843 = vmatpush1.bf16.msra.mxu0 %v65
    %844 = vmatprep.subr.bf16.mxu0 0
    %845 = vmatpush1.bf16.msra.mxu0 0
    %846 = vmatprep.subr.bf16.mxu0 0
    %847 = vmatpush1.bf16.msra.mxu0 0
    %848 = vmatprep.subr.bf16.mxu0 0
    %849 = vmatpush1.bf16.msra.mxu0 0
    %850 = vmatprep.subr.bf16.mxu0 0
    %851 = vmatpush1.bf16.msra.mxu0 0
    %852 = vmatprep.subr.bf16.mxu0 0
    %853 = vmatpush1.bf16.msra.mxu0 0
    %854 = vmatprep.subr.bf16.mxu0 0
    %855 = vmatpush1.bf16.msra.mxu0 0
    %856 = vmatprep.subr.bf16.mxu0 0
    %857 = vmatpush1.bf16.msra.mxu0 0
    %858 = vmatprep.subr.bf16.mxu0 0
    %859 = vmatpush1.bf16.msra.mxu0 0
    %860 = vmatprep.mubr.bf16.mxu0 0
    %861 = vmatmul.mubr.bf16.gmra.mrb[0].mxu0 %v827
    %v862 = vpop.f32.mrb[0].mxu0
    %v863 = vadd.f32 0.0, %v862
    %v864 = vpop.f32.mrb[0].mxu0
    %v865 = vpop.f32.mrb[0].mxu0
    %v866 = vpop.f32.mrb[0].mxu0
    %867 = vdwg.mxu0
    %v868 = vadd.f32 %v421, %v863
    %v869 = vtanh.pop %v868
    %v870 = vpack.c.bf16 %v869, %v869
    %871 = vmatprep.subr.bf16.mxu0 0
    %872 = vmatpush1.bf16.msra.mxu0 %v58
    %873 = vmatprep.subr.bf16.mxu0 0
    %874 = vmatpush1.bf16.msra.mxu0 %v59
    %875 = vmatprep.subr.bf16.mxu0 0
    %876 = vmatpush1.bf16.msra.mxu0 %v60
    %877 = vmatprep.subr.bf16.mxu0 0
    %878 = vmatpush1.bf16.msra.mxu0 %v61
    %879 = vmatprep.subr.bf16.mxu0 0
    %880 = vmatpush1.bf16.msra.mxu0 %v62
    %881 = vmatprep.subr.bf16.mxu0 0
    %882 = vmatpush1.bf16.msra.mxu0 %v63
    %883 = vmatprep.subr.bf16.mxu0 0
    %884 = vmatpush1.bf16.msra.mxu0 %v64
    %885 = vmatprep.subr.bf16.mxu0 0
    %886 = vmatpush1.bf16.msra.mxu0 %v65
    %887 = vmatprep.subr.bf16.mxu0 0
    %888 = vmatpush1.bf16.msra.mxu0 0
    %889 = vmatprep.subr.bf16.mxu0 0
    %890 = vmatpush1.bf16.msra.mxu0 0
    %891 = vmatprep.subr.bf16.mxu0 0
    %892 = vmatpush1.bf16.msra.mxu0 0
    %893 = vmatprep.subr.bf16.mxu0 0
    %894 = vmatpush1.bf16.msra.mxu0 0
    %895 = vmatprep.subr.bf16.mxu0 0
    %896 = vmatpush1.bf16.msra.mxu0 0
    %897 = vmatprep.subr.bf16.mxu0 0
    %898 = vmatpush1.bf16.msra.mxu0 0
    %899 = vmatprep.subr.bf16.mxu0 0
    %900 = vmatpush1.bf16.msra.mxu0 0
    %901 = vmatprep.subr.bf16.mxu0 0
    %902 = vmatpush1.bf16.msra.mxu0 0
    %903 = vmatprep.mubr.bf16.mxu0 0
    %904 = vmatmul.mubr.bf16.gmra.mrb[0].mxu0 %v870
    %v905 = vpop.f32.mrb[0].mxu0
    %v906 = vadd.f32 0.0, %v905
    %v907 = vpop.f32.mrb[0].mxu0
    %v908 = vpop.f32.mrb[0].mxu0
    %v909 = vpop.f32.mrb[0].mxu0
    %910 = vdwg.mxu0
    %v911 = vadd.f32 %v500, %v906
    %v912 = vtanh.pop %v911
    %v913 = vpack.c.bf16 %v912, %v912
    %914 = vmatprep.subr.bf16.mxu0 0
    %915 = vmatpush1.bf16.msra.mxu0 %v58
    %916 = vmatprep.subr.bf16.mxu0 0
    %917 = vmatpush1.bf16.msra.mxu0 %v59
    %918 = vmatprep.subr.bf16.mxu0 0
    %919 = vmatpush1.bf16.msra.mxu0 %v60
    %920 = vmatprep.subr.bf16.mxu0 0
    %921 = vmatpush1.bf16.msra.mxu0 %v61
    %922 = vmatprep.subr.bf16.mxu0 0
    %923 = vmatpush1.bf16.msra.mxu0 %v62
    %924 = vmatprep.subr.bf16.mxu0 0
    %925 = vmatpush1.bf16.msra.mxu0 %v63
    %926 = vmatprep.subr.bf16.mxu0 0
    %927 = vmatpush1.bf16.msra.mxu0 %v64
    %928 = vmatprep.subr.bf16.mxu0 0
    %929 = vmatpush1.bf16.msra.mxu0 %v65
    %930 = vmatprep.subr.bf16.mxu0 0
    %931 = vmatpush1.bf16.msra.mxu0 0
    %932 = vmatprep.subr.bf16.mxu0 0
    %933 = vmatpush1.bf16.msra.mxu0 0
    %934 = vmatprep.subr.bf16.mxu0 0
    %935 = vmatpush1.bf16.msra.mxu0 0
    %936 = vmatprep.subr.bf16.mxu0 0
    %937 = vmatpush1.bf16.msra.mxu0 0
    %938 = vmatprep.subr.bf16.mxu0 0
    %939 = vmatpush1.bf16.msra.mxu0 0
    %940 = vmatprep.subr.bf16.mxu0 0
    %941 = vmatpush1.bf16.msra.mxu0 0
    %942 = vmatprep.subr.bf16.mxu0 0
    %943 = vmatpush1.bf16.msra.mxu0 0
    %944 = vmatprep.subr.bf16.mxu0 0
    %945 = vmatpush1.bf16.msra.mxu0 0
    %946 = vmatprep.mubr.bf16.mxu0 0
    %947 = vmatmul.mubr.bf16.gmra.mrb[0].mxu0 %v913
    %v948 = vpop.f32.mrb[0].mxu0
    %v949 = vadd.f32 0.0, %v948
    %v950 = vpop.f32.mrb[0].mxu0
    %v951 = vpop.f32.mrb[0].mxu0
    %v952 = vpop.f32.mrb[0].mxu0
    %953 = vdwg.mxu0
    %v954 = vadd.f32 %v579, %v949
    %v955 = vtanh.pop %v954
    %v956 = vpack.c.bf16 %v955, %v955
    %957 = vmatprep.subr.bf16.mxu0 0
    %958 = vmatpush1.bf16.msra.mxu0 %v58
    %959 = vmatprep.subr.bf16.mxu0 0
    %960 = vmatpush1.bf16.msra.mxu0 %v59
    %961 = vmatprep.subr.bf16.mxu0 0
    %962 = vmatpush1.bf16.msra.mxu0 %v60
    %963 = vmatprep.subr.bf16.mxu0 0
    %964 = vmatpush1.bf16.msra.mxu0 %v61
    %965 = vmatprep.subr.bf16.mxu0 0
    %966 = vmatpush1.bf16.msra.mxu0 %v62
    %967 = vmatprep.subr.bf16.mxu0 0
    %968 = vmatpush1.bf16.msra.mxu0 %v63
    %969 = vmatprep.subr.bf16.mxu0 0
    %970 = vmatpush1.bf16.msra.mxu0 %v64
    %971 = vmatprep.subr.bf16.mxu0 0
    %972 = vmatpush1.bf16.msra.mxu0 %v65
    %973 = vmatprep.subr.bf16.mxu0 0
    %974 = vmatpush1.bf16.msra.mxu0 0
    %975 = vmatprep.subr.bf16.mxu0 0
    %976 = vmatpush1.bf16.msra.mxu0 0
    %977 = vmatprep.subr.bf16.mxu0 0
    %978 = vmatpush1.bf16.msra.mxu0 0
    %979 = vmatprep.subr.bf16.mxu0 0
    %980 = vmatpush1.bf16.msra.mxu0 0
    %981 = vmatprep.subr.bf16.mxu0 0
    %982 = vmatpush1.bf16.msra.mxu0 0
    %983 = vmatprep.subr.bf16.mxu0 0
    %984 = vmatpush1.bf16.msra.mxu0 0
    %985 = vmatprep.subr.bf16.mxu0 0
    %986 = vmatpush1.bf16.msra.mxu0 0
    %987 = vmatprep.subr.bf16.mxu0 0
    %988 = vmatpush1.bf16.msra.mxu0 0
    %989 = vmatprep.mubr.bf16.mxu0 0
    %990 = vmatmul.mubr.bf16.gmra.mrb[0].mxu0 %v956
    %v991 = vpop.f32.mrb[0].mxu0
    %v992 = vadd.f32 0.0, %v991
    %v993 = vpop.f32.mrb[0].mxu0
    %v994 = vpop.f32.mrb[0].mxu0
    %v995 = vpop.f32.mrb[0].mxu0
    %996 = vdwg.mxu0
    %v997 = vadd.f32 %v658, %v992
    %v998 = vtanh.pop %v997
    %v999 = vpack.c.bf16 %v998, %v998
    %1000 = vmatprep.subr.bf16.mxu0 0
    %1001 = vmatpush1.bf16.msra.mxu0 %v58
    %1002 = vmatprep.subr.bf16.mxu0 0
    %1003 = vmatpush1.bf16.msra.mxu0 %v59
    %1004 = vmatprep.subr.bf16.mxu0 0
    %1005 = vmatpush1.bf16.msra.mxu0 %v60
    %1006 = vmatprep.subr.bf16.mxu0 0
    %1007 = vmatpush1.bf16.msra.mxu0 %v61
    %1008 = vmatprep.subr.bf16.mxu0 0
    %1009 = vmatpush1.bf16.msra.mxu0 %v62
    %1010 = vmatprep.subr.bf16.mxu0 0
    %1011 = vmatpush1.bf16.msra.mxu0 %v63
    %1012 = vmatprep.subr.bf16.mxu0 0
    %1013 = vmatpush1.bf16.msra.mxu0 %v64
    %1014 = vmatprep.subr.bf16.mxu0 0
    %1015 = vmatpush1.bf16.msra.mxu0 %v65
    %1016 = vmatprep.subr.bf16.mxu0 0
    %1017 = vmatpush1.bf16.msra.mxu0 0
    %1018 = vmatprep.subr.bf16.mxu0 0
    %1019 = vmatpush1.bf16.msra.mxu0 0
    %1020 = vmatprep.subr.bf16.mxu0 0
    %1021 = vmatpush1.bf16.msra.mxu0 0
    %1022 = vmatprep.subr.bf16.mxu0 0
    %1023 = vmatpush1.bf16.msra.mxu0 0
    %1024 = vmatprep.subr.bf16.mxu0 0
    %1025 = vmatpush1.bf16.msra.mxu0 0
    %1026 = vmatprep.subr.bf16.mxu0 0
    %1027 = vmatpush1.bf16.msra.mxu0 0
    %1028 = vmatprep.subr.bf16.mxu0 0
    %1029 = vmatpush1.bf16.msra.mxu0 0
    %1030 = vmatprep.subr.bf16.mxu0 0
    %1031 = vmatpush1.bf16.msra.mxu0 0
    %1032 = vmatprep.mubr.bf16.mxu0 0
    %1033 = vmatmul.mubr.bf16.gmra.mrb[0].mxu0 %v999
    %v1034 = vpop.f32.mrb[0].mxu0
    %v1035 = vadd.f32 0.0, %v1034
    %v1036 = vpop.f32.mrb[0].mxu0
    %v1037 = vpop.f32.mrb[0].mxu0
    %v1038 = vpop.f32.mrb[0].mxu0
    %1039 = vdwg.mxu0
    %v1040 = vadd.f32 %v737, %v1035
    %v1041 = vtanh.pop %v1040
    %v1042 = vlaneseq
    %v1043 = vshrl.u32 %v1042, 7
    %v1044 = vsub.s32 0, %v1043
    %v1045 = vrot.slane %v82, %v1044
    %1046 = vmatprep.subr.mxu0 0.0
    %1047 = vmatpush1.msra.mxu0 %v66
    %1048 = vmatprep.subr.mxu0 0.0
    %1049 = vmatpush1.msra.mxu0 %v67
    %1050 = vmatprep.subr.mxu0 0.0
    %1051 = vmatpush1.msra.mxu0 %v68
    %1052 = vmatprep.subr.mxu0 0.0
    %1053 = vmatpush1.msra.mxu0 %v69
    %1054 = vmatprep.subr.mxu0 0.0
    %1055 = vmatpush1.msra.mxu0 %v70
    %1056 = vmatprep.subr.mxu0 0.0
    %1057 = vmatpush1.msra.mxu0 %v71
    %1058 = vmatprep.subr.mxu0 0.0
    %1059 = vmatpush1.msra.mxu0 %v72
    %1060 = vmatprep.subr.mxu0 0.0
    %1061 = vmatpush1.msra.mxu0 %v73
    %1062 = vmatprep.subr.mxu0 0.0
    %1063 = vmatpush1.msra.mxu0 %v74
    %1064 = vmatprep.subr.mxu0 0.0
    %1065 = vmatpush1.msra.mxu0 %v75
    %1066 = vmatprep.subr.mxu0 0.0
    %1067 = vmatpush1.msra.mxu0 %v76
    %1068 = vmatprep.subr.mxu0 0.0
    %1069 = vmatpush1.msra.mxu0 %v77
    %1070 = vmatprep.subr.mxu0 0.0
    %1071 = vmatpush1.msra.mxu0 %v78
    %1072 = vmatprep.subr.mxu0 0.0
    %1073 = vmatpush1.msra.mxu0 %v79
    %1074 = vmatprep.subr.mxu0 0.0
    %1075 = vmatpush1.msra.mxu0 %v80
    %1076 = vmatprep.subr.mxu0 0.0
    %1077 = vmatpush1.msra.mxu0 %v81
    %1078 = vmatprep.subr.mxu0 0.0
    %1079 = vmatpush1.msra.mxu0 0.0
    %1080 = vmatprep.subr.mxu0 0.0
    %1081 = vmatpush1.msra.mxu0 0.0
    %1082 = vmatprep.subr.mxu0 0.0
    %1083 = vmatpush1.msra.mxu0 0.0
    %1084 = vmatprep.subr.mxu0 0.0
    %1085 = vmatpush1.msra.mxu0 0.0
    %1086 = vmatprep.subr.mxu0 0.0
    %1087 = vmatpush1.msra.mxu0 0.0
    %1088 = vmatprep.subr.mxu0 0.0
    %1089 = vmatpush1.msra.mxu0 0.0
    %1090 = vmatprep.subr.mxu0 0.0
    %1091 = vmatpush1.msra.mxu0 0.0
    %1092 = vmatprep.subr.mxu0 0.0
    %1093 = vmatpush1.msra.mxu0 0.0
    %1094 = vmatprep.subr.mxu0 0.0
    %1095 = vmatpush1.msra.mxu0 0.0
    %1096 = vmatprep.subr.mxu0 0.0
    %1097 = vmatpush1.msra.mxu0 0.0
    %1098 = vmatprep.subr.mxu0 0.0
    %1099 = vmatpush1.msra.mxu0 0.0
    %1100 = vmatprep.subr.mxu0 0.0
    %1101 = vmatpush1.msra.mxu0 0.0
    %1102 = vmatprep.subr.mxu0 0.0
    %1103 = vmatpush1.msra.mxu0 0.0
    %1104 = vmatprep.subr.mxu0 0.0
    %1105 = vmatpush1.msra.mxu0 0.0
    %1106 = vmatprep.subr.mxu0 0.0
    %1107 = vmatpush1.msra.mxu0 0.0
    %1108 = vmatprep.subr.mxu0 0.0
    %1109 = vmatpush1.msra.mxu0 0.0
    %1110 = vmatprep.mubr.f32.mxu0 0.0
    %1111 = vmatmul.mubr.f32.gmra.mrb[0].mxu0 %v1041
    %v1112 = vpop.f32.mrb[0].mxu0
    %v1113 = vadd.f32 %v1045, %v1112
    %v1114 = vpop.f32.mrb[0].mxu0
    %1115 = vdwg.mxu0
    %v1116 = vmax.f32 %v1113, 0.0
    %v1117 = vlaneseq
    %v1118 = vshrl.u32 %v1117, 7
    %v1119 = vsub.s32 0, %v1118
    %v1120 = vrot.slane %v99, %v1119
    %1121 = vmatprep.subr.mxu0 0.0
    %1122 = vmatpush1.msra.mxu0 %v83
    %1123 = vmatprep.subr.mxu0 0.0
    %1124 = vmatpush1.msra.mxu0 %v84
    %1125 = vmatprep.subr.mxu0 0.0
    %1126 = vmatpush1.msra.mxu0 %v85
    %1127 = vmatprep.subr.mxu0 0.0
    %1128 = vmatpush1.msra.mxu0 %v86
    %1129 = vmatprep.subr.mxu0 0.0
    %1130 = vmatpush1.msra.mxu0 %v87
    %1131 = vmatprep.subr.mxu0 0.0
    %1132 = vmatpush1.msra.mxu0 %v88
    %1133 = vmatprep.subr.mxu0 0.0
    %1134 = vmatpush1.msra.mxu0 %v89
    %1135 = vmatprep.subr.mxu0 0.0
    %1136 = vmatpush1.msra.mxu0 %v90
    %1137 = vmatprep.subr.mxu0 0.0
    %1138 = vmatpush1.msra.mxu0 %v91
    %1139 = vmatprep.subr.mxu0 0.0
    %1140 = vmatpush1.msra.mxu0 %v92
    %1141 = vmatprep.subr.mxu0 0.0
    %1142 = vmatpush1.msra.mxu0 %v93
    %1143 = vmatprep.subr.mxu0 0.0
    %1144 = vmatpush1.msra.mxu0 %v94
    %1145 = vmatprep.subr.mxu0 0.0
    %1146 = vmatpush1.msra.mxu0 %v95
    %1147 = vmatprep.subr.mxu0 0.0
    %1148 = vmatpush1.msra.mxu0 %v96
    %1149 = vmatprep.subr.mxu0 0.0
    %1150 = vmatpush1.msra.mxu0 %v97
    %1151 = vmatprep.subr.mxu0 0.0
    %1152 = vmatpush1.msra.mxu0 %v98
    %1153 = vmatprep.subr.mxu0 0.0
    %1154 = vmatpush1.msra.mxu0 0.0
    %1155 = vmatprep.subr.mxu0 0.0
    %1156 = vmatpush1.msra.mxu0 0.0
    %1157 = vmatprep.subr.mxu0 0.0
    %1158 = vmatpush1.msra.mxu0 0.0
    %1159 = vmatprep.subr.mxu0 0.0
    %1160 = vmatpush1.msra.mxu0 0.0
    %1161 = vmatprep.subr.mxu0 0.0
    %1162 = vmatpush1.msra.mxu0 0.0
    %1163 = vmatprep.subr.mxu0 0.0
    %1164 = vmatpush1.msra.mxu0 0.0
    %1165 = vmatprep.subr.mxu0 0.0
    %1166 = vmatpush1.msra.mxu0 0.0
    %1167 = vmatprep.subr.mxu0 0.0
    %1168 = vmatpush1.msra.mxu0 0.0
    %1169 = vmatprep.subr.mxu0 0.0
    %1170 = vmatpush1.msra.mxu0 0.0
    %1171 = vmatprep.subr.mxu0 0.0
    %1172 = vmatpush1.msra.mxu0 0.0
    %1173 = vmatprep.subr.mxu0 0.0
    %1174 = vmatpush1.msra.mxu0 0.0
    %1175 = vmatprep.subr.mxu0 0.0
    %1176 = vmatpush1.msra.mxu0 0.0
    %1177 = vmatprep.subr.mxu0 0.0
    %1178 = vmatpush1.msra.mxu0 0.0
    %1179 = vmatprep.subr.mxu0 0.0
    %1180 = vmatpush1.msra.mxu0 0.0
    %1181 = vmatprep.subr.mxu0 0.0
    %1182 = vmatpush1.msra.mxu0 0.0
    %1183 = vmatprep.subr.mxu0 0.0
    %1184 = vmatpush1.msra.mxu0 0.0
    %1185 = vmatprep.mubr.f32.mxu0 0.0
    %1186 = vmatmul.mubr.f32.gmra.mrb[0].mxu0 %v1116
    %v1187 = vpop.f32.mrb[0].mxu0
    %v1188 = vadd.f32 %v1120, %v1187
    %v1189 = vpop.f32.mrb[0].mxu0
    %1190 = vdwg.mxu0
    %1191 = vst [vmem:[#allocation7] sm:$0xff] %v1188
    // Predicated region
    $region18: #{tpu_custom_call.1} parent=1 // pred_check
      _
    $region19: #{tpu_custom_call.1} parent=1 // pred_check_branch
      %1193 = sbr.rel (0) target = $region21
    $region20: #{tpu_custom_call.1} parent=1 // pred_region
      %s1195 = ssub.s32 128, 128
      %1196 = vsyncadd [#allocation4], %s1195
      %s1198 = sshll.u32 [#allocation7], 4
      %s1199 = int_to_ptr.vmem [resolvable:$true] %s1198
      %1201 = dma.vmem_to_hbm [thread:$0]  %s1199, 128, %s2, [#allocation4]
    $region21: #{tpu_custom_call.1} parent=1 // pred_fallthru
      _
    // Predicated region
    $region22: #{tpu_custom_call.1} parent=1 // pred_check
      _
    $region23: #{tpu_custom_call.1} parent=1 // pred_check_branch
      %1203 = sbr.rel (0) target = $region25
    $region24: #{tpu_custom_call.1} parent=1 // pred_region
      %1204 = dma.done [#allocation4], 128
    $region25: #{tpu_custom_call.1} parent=1 // pred_fallthru
      _
    %1205 = vsyncpa [#allocation3], 1
    %1206 = vsyncpa [#allocation6], 1
    %1207 = vsyncpa [#allocation4], 1

</llo_original>
